<compile_context>
chip_gen: v7x
topology: tpu7x:2x2x1
jax: 0.10.0
libtpu: 0.0.40
codegen_flags: <defaults>
</compile_context>

<pallas_src>
import functools

import jax
import jax.numpy as jnp
from jax import lax
from jax.experimental import pallas as pl
from jax.experimental.pallas import tpu as pltpu

EPS = 1e-06


# ------------------------------ device helpers ------------------------------

def _device_kind():
    try:
        return jax.devices()[0].device_kind.lower()
    except Exception:
        return ""


def _elementwise_dtype():
    # bf16 VPU/EUP exist on v6e/v7x; v5 chips must do elementwise math in f32.
    return jnp.float32 if "v5" in _device_kind() else jnp.bfloat16


def _vmem_budget_and_limit():
    # (tile-selection budget, vmem_limit cap) in bytes.
    if "v7" in _device_kind():
        return 40 * 1024 * 1024, 52 * 1024 * 1024    # 64 MiB physical per TC
    return 80 * 1024 * 1024, 100 * 1024 * 1024       # v5e / v6e: 128 MiB physical


# --------------------------------- kernel -----------------------------------

def _computed_word_linout_kernel(x_ref, inv_normx_ref, data_t_ref, wc_t_ref, bc_ref,
                                 o_ref, *, cosnorm, ew_dtype):
    # Build a (indim, tv) tile of the *transposed* output-embedding matrix:
    #   W_T = tanh(wc.T @ data.T + bc[:, None])
    # data_t_ref: (datadim, tv) bf16, wc_t_ref: (indim, datadim) bf16, bc_ref: (indim, 1) f32
    w_pre = jnp.dot(wc_t_ref[...], data_t_ref[...],
                    preferred_element_type=jnp.float32) + bc_ref[...]
    w_t = jnp.tanh(w_pre.astype(ew_dtype))                       # (indim, tv)

    # Logits tile: plain (B, indim) @ (indim, tv) MXU matmul, lane-dense output.
    out = jnp.dot(x_ref[...], w_t.astype(jnp.bfloat16),
                  preferred_element_type=jnp.float32)             # (B, tv) f32

    if cosnorm:
        # rsqrt(max(||w||^2, EPS^2)) == 1/max(||w||, EPS); (1, tv) column-norm vector
        # applied to the small (B, tv) output instead of the (indim, tv) weight tile.
        sumsq_w = jnp.sum((w_t * w_t).astype(jnp.float32), axis=0, keepdims=True)
        inv_normw = lax.rsqrt(jnp.maximum(sumsq_w, EPS * EPS))    # (1, tv)
        out = out * inv_normw * inv_normx_ref[...]                # (B,1) bcast

    o_ref[...] = out.astype(o_ref.dtype)


# ------------------------------ tile selection -------------------------------

def _per_col_bytes(B, indim, datadim, ew_bytes):
    # VMEM bytes per vocab column of one grid step.
    return (2 * datadim * 2          # double-buffered bf16 data.T tile
            + 2 * B * 4              # double-buffered f32 output tile
            + indim * (ew_bytes + 2) # W_T intermediate (+ bf16 matmul operand headroom)
            + 16)                    # (1, tv) norm vectors / misc


def _resident_bytes(B, indim, datadim):
    # x (bf16), wc.T (bf16), bc (f32), inv_normx (f32); assume 2 buffers each.
    return 2 * (B * indim * 2 + indim * datadim * 2 + indim * 4 + B * 4)


def _pick_tv(V, B, indim, datadim, ew_bytes, vmem_budget):
    if V % 128 != 0:
        return V                                    # single full-extent block
    per_col = _per_col_bytes(B, indim, datadim, ew_bytes)
    cap = (vmem_budget - _resident_bytes(B, indim, datadim)) // per_col
    cap = max(128, min(int(cap), 8192))
    cands = [t for t in range(128, min(cap, V) + 1, 128) if V % t == 0]
    if not cands:
        return 128 if V % 128 == 0 else V
    best = max(cands)
    even = [t for t in cands if (V // t) % 2 == 0]  # even step count -> both v7x TCs busy
    if even and max(even) * 2 >= best:
        return max(even)
    return best


# ------------------------------ module wrapper -------------------------------

def prepare_computer_params(data, wc, bc, ew_dtype=None):
    """One-time transform of the module buffers (module-init analogue): pre-transpose
    and pre-cast so the per-call kernel streams them directly (no per-call HBM pass
    over the big `data` array)."""
    if ew_dtype is None:
        ew_dtype = _elementwise_dtype()
    data_t = jnp.asarray(data, dtype=jnp.float32).T.astype(jnp.bfloat16)   # (datadim, V)
    wc_t = jnp.asarray(wc, dtype=jnp.float32).T.astype(jnp.bfloat16)       # (indim, datadim)
    bc_col = jnp.asarray(bc, dtype=jnp.float32).reshape(-1, 1)             # (indim, 1)
    return data_t, wc_t, bc_col, ew_dtype


def computed_word_linout(x, params, *, cosnorm=True, tv=None):
    """x: (B, indim) f32; params from prepare_computer_params(). Returns (B, V) f32."""
    data_t, wc_t, bc_col, ew_dtype = params
    datadim, V = data_t.shape
    indim = wc_t.shape[0]
    B = x.shape[0]
    assert x.shape == (B, indim)
    assert wc_t.shape == (indim, datadim)
    assert bc_col.shape == (indim, 1)

    ew_bytes = jnp.dtype(ew_dtype).itemsize
    vmem_budget, vmem_cap = _vmem_budget_and_limit()
    if tv is None:
        tv = _pick_tv(V, B, indim, datadim, ew_bytes, vmem_budget)
    assert V % tv == 0, "vocab must be a multiple of the vocab tile"

    # Per-call small ops only: bf16 copy of x and the vocab-tile-invariant 1/||x||.
    x_bf = x.astype(jnp.bfloat16)
    if cosnorm:
        inv_normx = lax.rsqrt(
            jnp.maximum(jnp.sum(x * x, axis=1, keepdims=True), EPS * EPS)
        ).astype(jnp.float32)                                   # (B, 1)
    else:
        inv_normx = jnp.ones((B, 1), dtype=jnp.float32)

    kernel = functools.partial(_computed_word_linout_kernel,
                               cosnorm=cosnorm, ew_dtype=ew_dtype)

    grid_spec = pltpu.PrefetchScalarGridSpec(
        num_scalar_prefetch=0,
        grid=(V // tv,),
        in_specs=[
            pl.BlockSpec((B, indim), lambda j: (0, 0)),         # x (resident, bf16)
            pl.BlockSpec((B, 1), lambda j: (0, 0)),             # 1/||x|| (resident, f32)
            pl.BlockSpec((datadim, tv), lambda j: (0, j)),       # data.T tile (streamed, bf16)
            pl.BlockSpec((indim, datadim), lambda j: (0, 0)),    # computer weight.T (resident)
            pl.BlockSpec((indim, 1), lambda j: (0, 0)),          # computer bias (resident, f32)
        ],
        out_specs=pl.BlockSpec((B, tv), lambda j: (0, j)),       # lane-dense logits tile
    )

    vmem_needed = (tv * _per_col_bytes(B, indim, datadim, ew_bytes)
                   + _resident_bytes(B, indim, datadim)
                   + (8 << 20))                                  # headroom
    vmem_limit = int(min(vmem_cap, max(32 << 20, vmem_needed)))

    return pl.pallas_call(
        kernel,
        out_shape=jax.ShapeDtypeStruct((B, V), jnp.float32),
        grid_spec=grid_spec,
        compiler_params=pltpu.CompilerParams(
            dimension_semantics=("parallel",),
            vmem_limit_bytes=vmem_limit,
        ),
    )(x_bf, inv_normx, data_t, wc_t, bc_col)


# -------------------------------- references ---------------------------------

def _reference_f32(x, data, wc, bc, cosnorm):
    weight = jnp.tanh(data @ wc + bc[None, :])
    out = x @ weight.T
    if cosnorm:
        normw = jnp.linalg.norm(weight, axis=1)
        normx = jnp.linalg.norm(x, axis=1)
        out = out / jnp.maximum(normw, EPS)[None, :]
        out = out / jnp.maximum(normx, EPS)[:, None]
    return out


# ----------------------------------- main -------------------------------------

if __name__ == "__main__":
    key = jax.random.PRNGKey(0)
    k_x, k_d, k_w, k_b = jax.random.split(key, 4)

    B, indim, datadim, V = 8, 128, 64, 1024   # small synthetic shapes

    x = jax.random.normal(k_x, (B, indim), dtype=jnp.float32)
    data = jax.random.normal(k_d, (V, datadim), dtype=jnp.float32)          # module's data buffer
    wc = jax.random.normal(k_w, (datadim, indim), dtype=jnp.float32) * 0.1  # computer params
    bc = jax.random.normal(k_b, (indim,), dtype=jnp.float32) * 0.1

    # One-time (module init) preparation of the computer/data buffers.
    params = prepare_computer_params(data, wc, bc)

    # cosnorm path
    out = jax.block_until_ready(computed_word_linout(x, params, cosnorm=True))
    assert out.shape == (B, V)
    ref = _reference_f32(x, data, wc, bc, True)
    # bf16 matmul inputs + bf16 tanh => loosened tolerance vs the f32 reference.
    assert jnp.allclose(out, ref, atol=5e-2, rtol=5e-2), "mismatch vs f32 reference (cosnorm)"

    # non-cosnorm path
    out2 = jax.block_until_ready(computed_word_linout(x, params, cosnorm=False))
    ref2 = _reference_f32(x, data, wc, bc, False)
    assert jnp.allclose(out2, ref2, atol=2e-1, rtol=5e-2), "mismatch vs f32 reference (no cosnorm)"

    print("KERNEL_OK")
</pallas_src>

<mosaic_0001>
module attributes {stable_mosaic.version = 11 : i64} {
  func.func @_computed_word_linout_kernel(%arg0: i32, %arg1: memref<8x128xbf16, #tpu.memory_space<vmem>>, %arg2: memref<8x1xf32, #tpu.memory_space<vmem>>, %arg3: memref<64x512xbf16, #tpu.memory_space<vmem>>, %arg4: memref<128x64xbf16, #tpu.memory_space<vmem>>, %arg5: memref<128x1xf32, #tpu.memory_space<vmem>>, %arg6: memref<8x512xf32, #tpu.memory_space<vmem>>) attributes {dimension_semantics = [#tpu.dimension_semantics<parallel>], iteration_bounds = array<i64: 2>, scalar_prefetch = 0 : i64, scratch_operands = 0 : i64, tpu.core_type = #tpu.core_type<tc>, window_params = [{pipeline_mode = #tpu.pipeline_mode<synchronous>, transform_indices = @transform_0, window_bounds = array<i64: 8, 128>}, {pipeline_mode = #tpu.pipeline_mode<synchronous>, transform_indices = @transform_1, window_bounds = array<i64: 8, 1>}, {transform_indices = @transform_2, window_bounds = array<i64: 64, 512>}, {pipeline_mode = #tpu.pipeline_mode<synchronous>, transform_indices = @transform_3, window_bounds = array<i64: 128, 64>}, {pipeline_mode = #tpu.pipeline_mode<synchronous>, transform_indices = @transform_4, window_bounds = array<i64: 128, 1>}, {transform_indices = @transform_5, window_bounds = array<i64: 8, 512>}]} {
    %c0 = arith.constant 0 : index
    %c0_0 = arith.constant 0 : index
    %0 = vector.load %arg4[%c0, %c0_0] : memref<128x64xbf16, #tpu.memory_space<vmem>>, vector<128x64xbf16>
    %c0_1 = arith.constant 0 : index
    %c0_2 = arith.constant 0 : index
    %1 = vector.load %arg3[%c0_1, %c0_2] : memref<64x512xbf16, #tpu.memory_space<vmem>>, vector<64x512xbf16>
    %cst = arith.constant dense<0.000000e+00> : vector<128x512xf32>
    %2 = tpu.matmul %0, %1, %cst {dimension_numbers = #tpu.dot_dimension_numbers<[1], [0], [0], [1], [0, 0, 1, 1], [], []>} : vector<128x64xbf16>, vector<64x512xbf16>, vector<128x512xf32> -> vector<128x512xf32>
    %c0_3 = arith.constant 0 : index
    %c0_4 = arith.constant 0 : index
    %3 = vector.load %arg5[%c0_3, %c0_4] : memref<128x1xf32, #tpu.memory_space<vmem>>, vector<128x1xf32>
    %4 = vector.broadcast %3 : vector<128x1xf32> to vector<128x512xf32>
    %5 = arith.addf %2, %4 : vector<128x512xf32>
    %6 = arith.truncf %5 : vector<128x512xf32> to vector<128x512xbf16>
    %7 = math.tanh %6 : vector<128x512xbf16>
    %c0_5 = arith.constant 0 : index
    %c0_6 = arith.constant 0 : index
    %8 = vector.load %arg1[%c0_5, %c0_6] : memref<8x128xbf16, #tpu.memory_space<vmem>>, vector<8x128xbf16>
    %cst_7 = arith.constant dense<0.000000e+00> : vector<8x512xf32>
    %9 = tpu.matmul %8, %7, %cst_7 {dimension_numbers = #tpu.dot_dimension_numbers<[1], [0], [0], [1], [0, 0, 1, 1], [], []>} : vector<8x128xbf16>, vector<128x512xbf16>, vector<8x512xf32> -> vector<8x512xf32>
    %10 = arith.mulf %7, %7 : vector<128x512xbf16>
    %11 = arith.extf %10 : vector<128x512xbf16> to vector<128x512xf32>
    %cst_8 = arith.constant dense<0.000000e+00> : vector<512xf32>
    %12 = vector.multi_reduction <add>, %11, %cst_8 [0] : vector<128x512xf32> to vector<512xf32>
    %13 = vector.shape_cast %12 : vector<512xf32> to vector<1x512xf32>
    %cst_9 = arith.constant 9.99999996E-13 : f32
    %14 = vector.broadcast %cst_9 : f32 to vector<1x512xf32>
    %15 = arith.maximumf %13, %14 : vector<1x512xf32>
    %16 = math.rsqrt %15 : vector<1x512xf32>
    %17 = vector.broadcast %16 : vector<1x512xf32> to vector<8x512xf32>
    %18 = arith.mulf %9, %17 : vector<8x512xf32>
    %c0_10 = arith.constant 0 : index
    %c0_11 = arith.constant 0 : index
    %19 = vector.load %arg2[%c0_10, %c0_11] : memref<8x1xf32, #tpu.memory_space<vmem>>, vector<8x1xf32>
    %20 = vector.broadcast %19 : vector<8x1xf32> to vector<8x512xf32>
    %21 = arith.mulf %18, %20 : vector<8x512xf32>
    %c0_12 = arith.constant 0 : index
    %c0_13 = arith.constant 0 : index
    %22 = vector.load %arg6[%c0_12, %c0_13] : memref<8x512xf32, #tpu.memory_space<vmem>>, vector<8x512xf32>
    tpu.vector_store %arg6[%c0_12, %c0_13], %21 {strides = array<i32>} : memref<8x512xf32, #tpu.memory_space<vmem>>, vector<8x512xf32>,
    return
  }
  func.func @transform_0(%arg0: i32) -> (i32, i32) {
    %c0_i32 = arith.constant 0 : i32
    %c0_i32_0 = arith.constant 0 : i32
    %c0_i32_1 = arith.constant 0 : i32
    return %c0_i32, %c0_i32_0 : i32, i32
  }
  func.func @transform_1(%arg0: i32) -> (i32, i32) {
    %c0_i32 = arith.constant 0 : i32
    %c0_i32_0 = arith.constant 0 : i32
    %c0_i32_1 = arith.constant 0 : i32
    return %c0_i32, %c0_i32_0 : i32, i32
  }
  func.func @transform_2(%arg0: i32) -> (i32, i32) {
    %c0_i32 = arith.constant 0 : i32
    %c0_i32_0 = arith.constant 0 : i32
    return %c0_i32, %arg0 : i32, i32
  }
  func.func @transform_3(%arg0: i32) -> (i32, i32) {
    %c0_i32 = arith.constant 0 : i32
    %c0_i32_0 = arith.constant 0 : i32
    %c0_i32_1 = arith.constant 0 : i32
    return %c0_i32, %c0_i32_0 : i32, i32
  }
  func.func @transform_4(%arg0: i32) -> (i32, i32) {
    %c0_i32 = arith.constant 0 : i32
    %c0_i32_0 = arith.constant 0 : i32
    %c0_i32_1 = arith.constant 0 : i32
    return %c0_i32, %c0_i32_0 : i32, i32
  }
  func.func @transform_5(%arg0: i32) -> (i32, i32) {
    %c0_i32 = arith.constant 0 : i32
    %c0_i32_0 = arith.constant 0 : i32
    return %c0_i32, %arg0 : i32, i32
  }
}

</mosaic_0001>

<llo_original>
// kernel: tpu_custom_call.1
$region0: #{tpu_custom_call.1}
  #allocation0 [shape = 'u32[]', space=smem, size = 0x4, offset = 0x4, fixed_abs, tag = 'smem constant byte address 0x4 - core index']
  #allocation1 [shape = 'u32[144,128]{1,0:T(1,128)}', space=vmem, size = 0x12000, scoped, tag = 'internal scratch']
  %s0 = inlined_call_operand.vmem [shape: bf16[8,128], index: 0, kind: input, shape index: {}]
  %s1 = inlined_call_operand.vmem [shape: f32[8,1], index: 1, kind: input, shape index: {}]
  %s2 = inlined_call_operand.hbm [shape: bf16[64,1024], index: 2, kind: input, shape index: {}]
  %s3 = inlined_call_operand.vmem [shape: bf16[128,64], index: 3, kind: input, shape index: {}]
  %s4 = inlined_call_operand.vmem [shape: f32[128,1], index: 4, kind: input, shape index: {}]
  %s5 = inlined_call_operand.hbm [shape: f32[8,1024], index: 5, kind: output, shape index: {}]
  %s6 = sld [smem:[#allocation0]]
  $region57: #{tpu_custom_call.1} parent=0
    _
  %s8 = ssub.s32 1, %s6
  %s9 = scalar_select 0, %s8, %s6
  $region1: #{tpu_custom_call.1} parent=0
    #allocation2 [shape = 'u8[131072]{0}', space=vmem, size = 0x20000, scoped, tag = 'input window, operand 2']
    #allocation3 [shape = 's32[2]{0}', space=sflag, size = 0x8, scoped, tag = 'scoped memory for tpu_custom_call.1']
    #allocation4 [shape = 's32[2]{0}', space=sflag, size = 0x8, scoped, tag = 'scoped memory for tpu_custom_call.1']
    #allocation5 [shape = 'u8[32768]{0}', space=vmem, size = 0x8000, scoped, tag = 'output window, operand 0']
    %10 = vsyncpa [#allocation3], 0
    %s11 = scalar_lea.sflag [#allocation3], 1
    %12 = vsyncpa %s11, 0
    %13 = vsyncpa [#allocation4], 0
    %s14 = scalar_lea.sflag [#allocation4], 1
    %15 = vsyncpa %s14, 0
    loop: start=0, step=1, limit=4
    $region2: #{tpu_custom_call.1} parent=1 // loop_pre_header
      _
    $region3: #{tpu_custom_call.1} parent=1 // loop_header
      %s17 = sphi 0, %s21
      %p18 = scmp.ge.s32.totalorder %s17, 4
      %s25 = sphi 0, %s25
      %s27 = sphi 0, %s25
      %s28 = sphi 0, %s27
      %s42 = sphi 0, %s28
      %s46 = sphi 0, %s46
      %s48 = sphi 0, %s46
      %s49 = sphi 0, %s48
      %s63 = sphi 0, %s49
      %s69 = sphi 0, %s71
      %s72 = sphi 0, %s69
      %s73 = sphi 0, %s72
      %s89 = sphi 0, %s73
      %s93 = sphi 0, %s93
      %s95 = sphi 0, %s93
      %s96 = sphi 0, %s95
      %s110 = sphi 0, %s96
      %s114 = sphi 0, %s114
      %s116 = sphi 0, %s114
      %s117 = sphi 0, %s116
      %s131 = sphi 0, %s117
      %s137 = sphi 0, %s139
      %s140 = sphi 0, %s137
      %s141 = sphi 0, %s140
      %s157 = sphi 0, %s141
    $region4: #{tpu_custom_call.1} parent=1 // loop_header_branch
      %20 = sbr.rel (%p18) target = $region8
    $region5: #{tpu_custom_call.1} parent=1 // loop_body
      %s22 = ssub.s32 %s17, 1
      %s23 = ssub.s32 %s17, 2
      %s24 = sadd.s32 %s17, 1
      %s26 = sadd.s32 %s25, 1
      %p29 = scmp.eq.s32.totalorder %s17, 1
      %p30 = scmp.ne.s32.totalorder %s25, %s27
      %p31 = scmp.eq.s32.totalorder %s17, 0
      %p32 = por %p30, %p31
      %p33 = scmp.ne.s32.totalorder %s25, %s27
      %p34 = scmp.eq.s32.totalorder %s22, 1
      %p35 = por %p33, %p34
      %p36 = scmp.ne.s32.totalorder %s27, %s28
      %p37 = scmp.eq.s32.totalorder %s22, 0
      %p38 = por %p36, %p37
      %p39 = scmp.ne.s32.totalorder %s27, %s28
      %p40 = scmp.eq.s32.totalorder %s23, 1
      %p41 = por %p39, %p40
      %p43 = scmp.ne.s32.totalorder %s28, %s42
      %p44 = scmp.eq.s32.totalorder %s23, 0
      %p45 = por %p43, %p44
      %s47 = sadd.s32 %s46, 1
      %p50 = scmp.eq.s32.totalorder %s17, 1
      %p51 = scmp.ne.s32.totalorder %s46, %s48
      %p52 = scmp.eq.s32.totalorder %s17, 0
      %p53 = por %p51, %p52
      %p54 = scmp.ne.s32.totalorder %s46, %s48
      %p55 = scmp.eq.s32.totalorder %s22, 1
      %p56 = por %p54, %p55
      %p57 = scmp.ne.s32.totalorder %s48, %s49
      %p58 = scmp.eq.s32.totalorder %s22, 0
      %p59 = por %p57, %p58
      %p60 = scmp.ne.s32.totalorder %s48, %s49
      %p61 = scmp.eq.s32.totalorder %s23, 1
      %p62 = por %p60, %p61
      %p64 = scmp.ne.s32.totalorder %s49, %s63
      %p65 = scmp.eq.s32.totalorder %s23, 0
      %p66 = por %p64, %p65
      %s67 = ssub.s32 %s17, %s24
      %p68 = scmp.eq.s32.totalorder %s67, 0
      %s70 = sadd.s32 %s69, 1
      %s71 = scalar_select %p68, %s69, %s70
      %p74 = pneg %p68
      %p75 = scmp.eq.s32.totalorder %s17, 1
      %p76 = por %p74, %p75
      %p77 = scmp.ne.s32.totalorder %s69, %s72
      %p78 = scmp.eq.s32.totalorder %s17, 0
      %p79 = por %p77, %p78
      %p80 = scmp.ne.s32.totalorder %s69, %s72
      %p81 = scmp.eq.s32.totalorder %s22, 1
      %p82 = por %p80, %p81
      %p83 = scmp.ne.s32.totalorder %s72, %s73
      %p84 = scmp.eq.s32.totalorder %s22, 0
      %p85 = por %p83, %p84
      %p86 = scmp.ne.s32.totalorder %s72, %s73
      %p87 = scmp.eq.s32.totalorder %s23, 1
      %p88 = por %p86, %p87
      %p90 = scmp.ne.s32.totalorder %s73, %s89
      %p91 = scmp.eq.s32.totalorder %s23, 0
      %p92 = por %p90, %p91
      %s94 = sadd.s32 %s93, 1
      %p97 = scmp.eq.s32.totalorder %s17, 1
      %p98 = scmp.ne.s32.totalorder %s93, %s95
      %p99 = scmp.eq.s32.totalorder %s17, 0
      %p100 = por %p98, %p99
      %p101 = scmp.ne.s32.totalorder %s93, %s95
      %p102 = scmp.eq.s32.totalorder %s22, 1
      %p103 = por %p101, %p102
      %p104 = scmp.ne.s32.totalorder %s95, %s96
      %p105 = scmp.eq.s32.totalorder %s22, 0
      %p106 = por %p104, %p105
      %p107 = scmp.ne.s32.totalorder %s95, %s96
      %p108 = scmp.eq.s32.totalorder %s23, 1
      %p109 = por %p107, %p108
      %p111 = scmp.ne.s32.totalorder %s96, %s110
      %p112 = scmp.eq.s32.totalorder %s23, 0
      %p113 = por %p111, %p112
      %s115 = sadd.s32 %s114, 1
      %p118 = scmp.eq.s32.totalorder %s17, 1
      %p119 = scmp.ne.s32.totalorder %s114, %s116
      %p120 = scmp.eq.s32.totalorder %s17, 0
      %p121 = por %p119, %p120
      %p122 = scmp.ne.s32.totalorder %s114, %s116
      %p123 = scmp.eq.s32.totalorder %s22, 1
      %p124 = por %p122, %p123
      %p125 = scmp.ne.s32.totalorder %s116, %s117
      %p126 = scmp.eq.s32.totalorder %s22, 0
      %p127 = por %p125, %p126
      %p128 = scmp.ne.s32.totalorder %s116, %s117
      %p129 = scmp.eq.s32.totalorder %s23, 1
      %p130 = por %p128, %p129
      %p132 = scmp.ne.s32.totalorder %s117, %s131
      %p133 = scmp.eq.s32.totalorder %s23, 0
      %p134 = por %p132, %p133
      %s135 = ssub.s32 %s17, %s24
      %p136 = scmp.eq.s32.totalorder %s135, 0
      %s138 = sadd.s32 %s137, 1
      %s139 = scalar_select %p136, %s137, %s138
      %p142 = pneg %p136
      %p143 = scmp.eq.s32.totalorder %s17, 1
      %p144 = por %p142, %p143
      %p145 = scmp.ne.s32.totalorder %s137, %s140
      %p146 = scmp.eq.s32.totalorder %s17, 0
      %p147 = por %p145, %p146
      %p148 = scmp.ne.s32.totalorder %s137, %s140
      %p149 = scmp.eq.s32.totalorder %s22, 1
      %p150 = por %p148, %p149
      %p151 = scmp.ne.s32.totalorder %s140, %s141
      %p152 = scmp.eq.s32.totalorder %s22, 0
      %p153 = por %p151, %p152
      %p154 = scmp.ne.s32.totalorder %s140, %s141
      %p155 = scmp.eq.s32.totalorder %s23, 1
      %p156 = por %p154, %p155
      %p158 = scmp.ne.s32.totalorder %s141, %s157
      %p159 = scmp.eq.s32.totalorder %s23, 0
      %p160 = por %p158, %p159
      %p161 = scmp.le.s32.totalorder 1, %s17
      %p162 = scmp.lt.s32.totalorder %s17, 3
      %p163 = pnand %p161, %p162
      %p164 = pneg %p163
      // Predicated region
      $region9: #{tpu_custom_call.1} parent=5 // pred_check
        _
      $region10: #{tpu_custom_call.1} parent=5 // pred_check_branch
        %166 = sbr.rel (%p163) target = $region12
      $region11: #{tpu_custom_call.1} parent=5 // pred_region
        %s167 = ssub.s32 %s17, 1
        // Predicated region
        $region13: #{tpu_custom_call.1} parent=11 // pred_check
          %p168 = pneg %p38
        $region14: #{tpu_custom_call.1} parent=11 // pred_check_branch
          %170 = sbr.rel (%p168) target = $region16
        $region15: #{tpu_custom_call.1} parent=11 // pred_region
          _
        $region16: #{tpu_custom_call.1} parent=11 // pred_fallthru
          _
        // Predicated region
        $region17: #{tpu_custom_call.1} parent=11 // pred_check
          %p171 = pneg %p59
        $region18: #{tpu_custom_call.1} parent=11 // pred_check_branch
          %173 = sbr.rel (%p171) target = $region20
        $region19: #{tpu_custom_call.1} parent=11 // pred_region
          _
        $region20: #{tpu_custom_call.1} parent=11 // pred_fallthru
          _
        // Predicated region
        $region21: #{tpu_custom_call.1} parent=11 // pred_check
          %p174 = pneg %p106
        $region22: #{tpu_custom_call.1} parent=11 // pred_check_branch
          %176 = sbr.rel (%p174) target = $region24
        $region23: #{tpu_custom_call.1} parent=11 // pred_region
          _
        $region24: #{tpu_custom_call.1} parent=11 // pred_fallthru
          _
        // Predicated region
        $region25: #{tpu_custom_call.1} parent=11 // pred_check
          %p177 = pneg %p127
        $region26: #{tpu_custom_call.1} parent=11 // pred_check_branch
          %179 = sbr.rel (%p177) target = $region28
        $region27: #{tpu_custom_call.1} parent=11 // pred_region
          _
        $region28: #{tpu_custom_call.1} parent=11 // pred_fallthru
          _
      $region12: #{tpu_custom_call.1} parent=5 // pred_fallthru
        _
      %p180 = scmp.lt.s32.totalorder %s17, 2
      // Predicated region
      $region29: #{tpu_custom_call.1} parent=5 // pred_check
        %p181 = pneg %p180
      $region30: #{tpu_custom_call.1} parent=5 // pred_check_branch
        %183 = sbr.rel (%p181) target = $region32
      $region31: #{tpu_custom_call.1} parent=5 // pred_region
        // Predicated region
        $region33: #{tpu_custom_call.1} parent=31 // pred_check
          %p184 = pneg %p79
        $region34: #{tpu_custom_call.1} parent=31 // pred_check_branch
          %186 = sbr.rel (%p184) target = $region36
        $region35: #{tpu_custom_call.1} parent=31 // pred_region
          %s187 = sand.u32 %s69, 1
          %s188 = scalar_lea.sflag [#allocation3], %s187
          %s189 = sand.u32 %s69, 1
          %s190 = smul.addr %s189, 128
          %s191 = scalar_lea.vmem [#allocation2], %s190
          %s192 = smul.u32 4, %s17
          %s194 = ssub.s32 2048, 2048
          %195 = vsyncadd %s188, %s194
          %s196 = smul.addr %s192, 64
          %s197 = scalar_lea.hbm %s2, %s196
          %s198 = sshll.u32 %s191, 4
          %s199 = int_to_ptr.vmem [resolvable:$true] %s198
          %204 = dma.hbm_to_vmem [thread:$0]  %s197, 2048, %s199, %s188, 512, 256, 16
        $region36: #{tpu_custom_call.1} parent=31 // pred_fallthru
          _
      $region32: #{tpu_custom_call.1} parent=5 // pred_fallthru
        _
      %p205 = scmp.le.s32.totalorder 1, %s17
      %p206 = scmp.lt.s32.totalorder %s17, 3
      %p207 = pnand %p205, %p206
      %p208 = pneg %p207
      // Predicated region
      $region37: #{tpu_custom_call.1} parent=5 // pred_check
        _
      $region38: #{tpu_custom_call.1} parent=5 // pred_check_branch
        %210 = sbr.rel (%p207) target = $region40
      $region39: #{tpu_custom_call.1} parent=5 // pred_region
        %s211 = ssub.s32 %s17, 1
        %s212 = sand.u32 %s72, 1
        %s213 = scalar_lea.sflag [#allocation3], %s212
        %s214 = sand.u32 %s72, 1
        %s215 = smul.addr %s214, 128
        %s216 = scalar_lea.vmem [#allocation2], %s215
        // Predicated region
        $region41: #{tpu_custom_call.1} parent=39 // pred_check
          %p217 = pneg %p85
        $region42: #{tpu_custom_call.1} parent=39 // pred_check_branch
          %219 = sbr.rel (%p217) target = $region44
        $region43: #{tpu_custom_call.1} parent=39 // pred_region
          %220 = dma.done %s213, 2048
        $region44: #{tpu_custom_call.1} parent=39 // pred_fallthru
          _
        %p221 = pneg %p38
        %p222 = pneg %p35
        %p223 = pneg %p59
        %p224 = pneg %p56
        %s225 = sand.u32 %s72, 1
        %s226 = scalar_lea.sflag [#allocation3], %s225
        %s227 = sand.u32 %s72, 1
        %s228 = smul.addr %s227, 128
        %s229 = scalar_lea.vmem [#allocation2], %s228
        %p230 = pneg %p85
        %p231 = pneg %p82
        %p232 = pneg %p106
        %p233 = pneg %p103
        %p234 = pneg %p127
        %p235 = pneg %p124
        %p236 = pneg %p153
        %p237 = pneg %p150
        %s238 = sand.u32 %s140, 1
        %s239 = scalar_lea.sflag [#allocation4], %s238
        %s240 = sand.u32 %s140, 1
        %s241 = smul.addr %s240, 32
        %s242 = scalar_lea.vmem [#allocation5], %s241
        %s243 = smul.u32 4, %s22
        %s244 = smul.u32 4, %s22
        %v246 = vld [vmem:[%s3] sm:$0xf]
        %v247 = vld [vmem:[%s3 + $0x4] sm:$0xf]
        %v248 = vld [vmem:[%s3 + $0x8] sm:$0xf]
        %v249 = vld [vmem:[%s3 + $0xc] sm:$0xf]
        %v250 = vld [vmem:[%s3 + $0x10] sm:$0xf]
        %v251 = vld [vmem:[%s3 + $0x14] sm:$0xf]
        %v252 = vld [vmem:[%s3 + $0x18] sm:$0xf]
        %v253 = vld [vmem:[%s3 + $0x1c] sm:$0xf]
        %v254 = vld [vmem:[%s3 + $0x20] sm:$0xf]
        %v255 = vld [vmem:[%s3 + $0x24] sm:$0xf]
        %v256 = vld [vmem:[%s3 + $0x28] sm:$0xf]
        %v257 = vld [vmem:[%s3 + $0x2c] sm:$0xf]
        %v258 = vld [vmem:[%s3 + $0x30] sm:$0xf]
        %v259 = vld [vmem:[%s3 + $0x34] sm:$0xf]
        %v260 = vld [vmem:[%s3 + $0x38] sm:$0xf]
        %v261 = vld [vmem:[%s3 + $0x3c] sm:$0xf]
        %v262 = vld [vmem:[%s216] sm:$0xff]
        %v263 = vld [vmem:[%s216 + $0x8] sm:$0xff]
        %v264 = vld [vmem:[%s216 + $0x10] sm:$0xff]
        %v265 = vld [vmem:[%s216 + $0x18] sm:$0xff]
        %v266 = vld [vmem:[%s216 + $0x20] sm:$0xff]
        %v267 = vld [vmem:[%s216 + $0x28] sm:$0xff]
        %v268 = vld [vmem:[%s216 + $0x30] sm:$0xff]
        %v269 = vld [vmem:[%s216 + $0x38] sm:$0xff]
        %v270 = vld [vmem:[%s216 + $0x40] sm:$0xff]
        %v271 = vld [vmem:[%s216 + $0x48] sm:$0xff]
        %v272 = vld [vmem:[%s216 + $0x50] sm:$0xff]
        %v273 = vld [vmem:[%s216 + $0x58] sm:$0xff]
        %v274 = vld [vmem:[%s216 + $0x60] sm:$0xff]
        %v275 = vld [vmem:[%s216 + $0x68] sm:$0xff]
        %v276 = vld [vmem:[%s216 + $0x70] sm:$0xff]
        %v277 = vld [vmem:[%s216 + $0x78] sm:$0xff]
        %v278 = vld [vmem:[%s4] sm:$0xff]
        %v279 = vld [vmem:[%s4 + $0x8] sm:$0xff]
        %v280 = vld [vmem:[%s4 + $0x10] sm:$0xff]
        %v281 = vld [vmem:[%s4 + $0x18] sm:$0xff]
        %v282 = vld [vmem:[%s4 + $0x20] sm:$0xff]
        %v283 = vld [vmem:[%s4 + $0x28] sm:$0xff]
        %v284 = vld [vmem:[%s4 + $0x30] sm:$0xff]
        %v285 = vld [vmem:[%s4 + $0x38] sm:$0xff]
        %v286 = vld [vmem:[%s4 + $0x40] sm:$0xff]
        %v287 = vld [vmem:[%s4 + $0x48] sm:$0xff]
        %v288 = vld [vmem:[%s4 + $0x50] sm:$0xff]
        %v289 = vld [vmem:[%s4 + $0x58] sm:$0xff]
        %v290 = vld [vmem:[%s4 + $0x60] sm:$0xff]
        %v291 = vld [vmem:[%s4 + $0x68] sm:$0xff]
        %v292 = vld [vmem:[%s4 + $0x70] sm:$0xff]
        %v293 = vld [vmem:[%s4 + $0x78] sm:$0xff]
        %295 = vset.pattern.permute.xlu0 0
        %296 = vperm.xlu0 %295, %v278
        %v297 = vpop.permute.xlu0 %296
        %300 = vset.pattern.permute.xlu0 0
        %301 = vperm.xlu0 %300, %v279
        %v302 = vpop.permute.xlu0 %301
        %305 = vset.pattern.permute.xlu0 0
        %306 = vperm.xlu0 %305, %v280
        %v307 = vpop.permute.xlu0 %306
        %310 = vset.pattern.permute.xlu0 0
        %311 = vperm.xlu0 %310, %v281
        %v312 = vpop.permute.xlu0 %311
        %315 = vset.pattern.permute.xlu0 0
        %316 = vperm.xlu0 %315, %v282
        %v317 = vpop.permute.xlu0 %316
        %320 = vset.pattern.permute.xlu0 0
        %321 = vperm.xlu0 %320, %v283
        %v322 = vpop.permute.xlu0 %321
        %325 = vset.pattern.permute.xlu0 0
        %326 = vperm.xlu0 %325, %v284
        %v327 = vpop.permute.xlu0 %326
        %330 = vset.pattern.permute.xlu0 0
        %331 = vperm.xlu0 %330, %v285
        %v332 = vpop.permute.xlu0 %331
        %335 = vset.pattern.permute.xlu0 0
        %336 = vperm.xlu0 %335, %v286
        %v337 = vpop.permute.xlu0 %336
        %340 = vset.pattern.permute.xlu0 0
        %341 = vperm.xlu0 %340, %v287
        %v342 = vpop.permute.xlu0 %341
        %345 = vset.pattern.permute.xlu0 0
        %346 = vperm.xlu0 %345, %v288
        %v347 = vpop.permute.xlu0 %346
        %350 = vset.pattern.permute.xlu0 0
        %351 = vperm.xlu0 %350, %v289
        %v352 = vpop.permute.xlu0 %351
        %355 = vset.pattern.permute.xlu0 0
        %356 = vperm.xlu0 %355, %v290
        %v357 = vpop.permute.xlu0 %356
        %360 = vset.pattern.permute.xlu0 0
        %361 = vperm.xlu0 %360, %v291
        %v362 = vpop.permute.xlu0 %361
        %365 = vset.pattern.permute.xlu0 0
        %366 = vperm.xlu0 %365, %v292
        %v367 = vpop.permute.xlu0 %366
        %370 = vset.pattern.permute.xlu0 0
        %371 = vperm.xlu0 %370, %v293
        %v372 = vpop.permute.xlu0 %371
        %v390 = vunpack.c.l.b16 %v246
        %v391 = vunpack.c.l.b16 %v247
        %v392 = vunpack.c.l.b16 %v248
        %v393 = vunpack.c.l.b16 %v249
        %v394 = vunpack.c.l.b16 %v250
        %v395 = vunpack.c.l.b16 %v251
        %v396 = vunpack.c.l.b16 %v252
        %v397 = vunpack.c.l.b16 %v253
        %v398 = vunpack.c.l.b16 %v254
        %v399 = vunpack.c.l.b16 %v255
        %v400 = vunpack.c.l.b16 %v256
        %v401 = vunpack.c.l.b16 %v257
        %v402 = vunpack.c.l.b16 %v258
        %v403 = vunpack.c.l.b16 %v259
        %v404 = vunpack.c.l.b16 %v260
        %v405 = vunpack.c.l.b16 %v261
        %v406 = vpack.c.b16 %v391, %v390
        %v407 = vpack.c.b16 %v393, %v392
        %v408 = vpack.c.b16 %v395, %v394
        %v409 = vpack.c.b16 %v397, %v396
        %v410 = vpack.c.b16 %v399, %v398
        %v411 = vpack.c.b16 %v401, %v400
        %v412 = vpack.c.b16 %v403, %v402
        %v413 = vpack.c.b16 %v405, %v404
        %v430 = vunpack.c.l.b16 %v262
        %v431 = vunpack.c.h.b16 %v262
        %v432 = vunpack.c.l.b16 %v263
        %v433 = vunpack.c.h.b16 %v263
        %v434 = vunpack.c.l.b16 %v264
        %v435 = vunpack.c.h.b16 %v264
        %v436 = vunpack.c.l.b16 %v265
        %v437 = vunpack.c.h.b16 %v265
        %v438 = vunpack.c.l.b16 %v266
        %v439 = vunpack.c.h.b16 %v266
        %v440 = vunpack.c.l.b16 %v267
        %v441 = vunpack.c.h.b16 %v267
        %v442 = vunpack.c.l.b16 %v268
        %v443 = vunpack.c.h.b16 %v268
        %v444 = vunpack.c.l.b16 %v269
        %v445 = vunpack.c.h.b16 %v269
        %v446 = vunpack.c.l.b16 %v270
        %v447 = vunpack.c.h.b16 %v270
        %v448 = vunpack.c.l.b16 %v271
        %v449 = vunpack.c.h.b16 %v271
        %v450 = vunpack.c.l.b16 %v272
        %v451 = vunpack.c.h.b16 %v272
        %v452 = vunpack.c.l.b16 %v273
        %v453 = vunpack.c.h.b16 %v273
        %v454 = vunpack.c.l.b16 %v274
        %v455 = vunpack.c.h.b16 %v274
        %v456 = vunpack.c.l.b16 %v275
        %v457 = vunpack.c.h.b16 %v275
        %v458 = vunpack.c.l.b16 %v276
        %v459 = vunpack.c.h.b16 %v276
        %v460 = vunpack.c.l.b16 %v277
        %v461 = vunpack.c.h.b16 %v277
        %v462 = vpack.c.b16 %v434, %v430
        %v463 = vpack.c.b16 %v435, %v431
        %v464 = vpack.c.b16 %v436, %v432
        %v465 = vpack.c.b16 %v437, %v433
        %v466 = vpack.c.b16 %v442, %v438
        %v467 = vpack.c.b16 %v443, %v439
        %v468 = vpack.c.b16 %v444, %v440
        %v469 = vpack.c.b16 %v445, %v441
        %v470 = vpack.c.b16 %v450, %v446
        %v471 = vpack.c.b16 %v451, %v447
        %v472 = vpack.c.b16 %v452, %v448
        %v473 = vpack.c.b16 %v453, %v449
        %v474 = vpack.c.b16 %v458, %v454
        %v475 = vpack.c.b16 %v459, %v455
        %v476 = vpack.c.b16 %v460, %v456
        %v477 = vpack.c.b16 %v461, %v457
        %vm494 = vcmask 523264
        %v496 = vsel %vm494, %v406, 0
        %v499 = vsel %vm494, %v407, 0
        %v502 = vsel %vm494, %v408, 0
        %v505 = vsel %vm494, %v409, 0
        %v508 = vsel %vm494, %v410, 0
        %v511 = vsel %vm494, %v411, 0
        %v514 = vsel %vm494, %v412, 0
        %v517 = vsel %vm494, %v413, 0
        %519 = vmatprep.subr.bf16.mxu0 %v463
        %520 = vmatpush1.bf16.msra.mxu0 %v462
        %521 = vmatprep.subr.bf16.mxu0 %v467
        %522 = vmatpush1.bf16.msra.mxu0 %v466
        %523 = vmatprep.subr.bf16.mxu0 %v471
        %524 = vmatpush1.bf16.msra.mxu0 %v470
        %525 = vmatprep.subr.bf16.mxu0 %v475
        %526 = vmatpush1.bf16.msra.mxu0 %v474
        %527 = vmatprep.subr.bf16.mxu0 0
        %528 = vmatpush1.bf16.msra.mxu0 0
        %529 = vmatprep.subr.bf16.mxu0 0
        %530 = vmatpush1.bf16.msra.mxu0 0
        %531 = vmatprep.subr.bf16.mxu0 0
        %532 = vmatpush1.bf16.msra.mxu0 0
        %533 = vmatprep.subr.bf16.mxu0 0
        %534 = vmatpush1.bf16.msra.mxu0 0
        %535 = vmatprep.subr.bf16.mxu0 0
        %536 = vmatpush1.bf16.msra.mxu0 0
        %537 = vmatprep.subr.bf16.mxu0 0
        %538 = vmatpush1.bf16.msra.mxu0 0
        %539 = vmatprep.subr.bf16.mxu0 0
        %540 = vmatpush1.bf16.msra.mxu0 0
        %541 = vmatprep.subr.bf16.mxu0 0
        %542 = vmatpush1.bf16.msra.mxu0 0
        %543 = vmatprep.subr.bf16.mxu0 0
        %544 = vmatpush1.bf16.msra.mxu0 0
        %545 = vmatprep.subr.bf16.mxu0 0
        %546 = vmatpush1.bf16.msra.mxu0 0
        %547 = vmatprep.subr.bf16.mxu0 0
        %548 = vmatpush1.bf16.msra.mxu0 0
        %549 = vmatprep.subr.bf16.mxu0 0
        %550 = vmatpush1.bf16.msra.mxu0 0
        %551 = vmatprep.mubr.bf16.mxu0 0
        %552 = vmatmul.mubr.bf16.gmra.mrb[0].mxu0 %v496
        %v553 = vpop.f32.mrb[0].mxu0
        %v554 = vadd.f32 %v297, %v553
        %v555 = vpop.f32.mrb[0].mxu0
        %v556 = vadd.f32 %v297, %v555
        %v557 = vpop.f32.mrb[0].mxu0
        %v558 = vadd.f32 %v302, %v557
        %v559 = vpop.f32.mrb[0].mxu0
        %v560 = vadd.f32 %v302, %v559
        %561 = vmatprep.mubr.bf16.mxu0 0
        %562 = vmatmul.mubr.bf16.gmra.mrb[0].mxu0 %v499
        %v563 = vpop.f32.mrb[0].mxu0
        %v564 = vadd.f32 %v307, %v563
        %v565 = vpop.f32.mrb[0].mxu0
        %v566 = vadd.f32 %v307, %v565
        %v567 = vpop.f32.mrb[0].mxu0
        %v568 = vadd.f32 %v312, %v567
        %v569 = vpop.f32.mrb[0].mxu0
        %v570 = vadd.f32 %v312, %v569
        %571 = vmatprep.mubr.bf16.mxu0 0
        %572 = vmatmul.mubr.bf16.gmra.mrb[0].mxu0 %v502
        %v573 = vpop.f32.mrb[0].mxu0
        %v574 = vadd.f32 %v317, %v573
        %v575 = vpop.f32.mrb[0].mxu0
        %v576 = vadd.f32 %v317, %v575
        %v577 = vpop.f32.mrb[0].mxu0
        %v578 = vadd.f32 %v322, %v577
        %v579 = vpop.f32.mrb[0].mxu0
        %v580 = vadd.f32 %v322, %v579
        %581 = vmatprep.mubr.bf16.mxu0 0
        %582 = vmatmul.mubr.bf16.gmra.mrb[0].mxu0 %v505
        %v583 = vpop.f32.mrb[0].mxu0
        %v584 = vadd.f32 %v327, %v583
        %v585 = vpop.f32.mrb[0].mxu0
        %v586 = vadd.f32 %v327, %v585
        %v587 = vpop.f32.mrb[0].mxu0
        %v588 = vadd.f32 %v332, %v587
        %v589 = vpop.f32.mrb[0].mxu0
        %v590 = vadd.f32 %v332, %v589
        %591 = vmatprep.mubr.bf16.mxu0 0
        %592 = vmatmul.mubr.bf16.gmra.mrb[0].mxu0 %v508
        %v593 = vpop.f32.mrb[0].mxu0
        %v594 = vadd.f32 %v337, %v593
        %v595 = vpop.f32.mrb[0].mxu0
        %v596 = vadd.f32 %v337, %v595
        %v597 = vpop.f32.mrb[0].mxu0
        %v598 = vadd.f32 %v342, %v597
        %v599 = vpop.f32.mrb[0].mxu0
        %v600 = vadd.f32 %v342, %v599
        %601 = vmatprep.mubr.bf16.mxu0 0
        %602 = vmatmul.mubr.bf16.gmra.mrb[0].mxu0 %v511
        %v603 = vpop.f32.mrb[0].mxu0
        %v604 = vadd.f32 %v347, %v603
        %v605 = vpop.f32.mrb[0].mxu0
        %v606 = vadd.f32 %v347, %v605
        %v607 = vpop.f32.mrb[0].mxu0
        %v608 = vadd.f32 %v352, %v607
        %v609 = vpop.f32.mrb[0].mxu0
        %v610 = vadd.f32 %v352, %v609
        %611 = vmatprep.mubr.bf16.mxu0 0
        %612 = vmatmul.mubr.bf16.gmra.mrb[0].mxu0 %v514
        %v613 = vpop.f32.mrb[0].mxu0
        %v614 = vadd.f32 %v357, %v613
        %v615 = vpop.f32.mrb[0].mxu0
        %v616 = vadd.f32 %v357, %v615
        %v617 = vpop.f32.mrb[0].mxu0
        %v618 = vadd.f32 %v362, %v617
        %v619 = vpop.f32.mrb[0].mxu0
        %v620 = vadd.f32 %v362, %v619
        %621 = vmatprep.mubr.bf16.mxu0 0
        %622 = vmatmul.mubr.bf16.gmra.mrb[0].mxu0 %v517
        %v623 = vpop.f32.mrb[0].mxu0
        %v624 = vadd.f32 %v367, %v623
        %v625 = vpop.f32.mrb[0].mxu0
        %v626 = vadd.f32 %v367, %v625
        %v627 = vpop.f32.mrb[0].mxu0
        %v628 = vadd.f32 %v372, %v627
        %v629 = vpop.f32.mrb[0].mxu0
        %v630 = vadd.f32 %v372, %v629
        %631 = vdwg.mxu0
        %632 = vmatprep.subr.bf16.mxu0 %v465
        %633 = vmatpush1.bf16.msra.mxu0 %v464
        %634 = vmatprep.subr.bf16.mxu0 %v469
        %635 = vmatpush1.bf16.msra.mxu0 %v468
        %636 = vmatprep.subr.bf16.mxu0 %v473
        %637 = vmatpush1.bf16.msra.mxu0 %v472
        %638 = vmatprep.subr.bf16.mxu0 %v477
        %639 = vmatpush1.bf16.msra.mxu0 %v476
        %640 = vmatprep.subr.bf16.mxu0 0
        %641 = vmatpush1.bf16.msra.mxu0 0
        %642 = vmatprep.subr.bf16.mxu0 0
        %643 = vmatpush1.bf16.msra.mxu0 0
        %644 = vmatprep.subr.bf16.mxu0 0
        %645 = vmatpush1.bf16.msra.mxu0 0
        %646 = vmatprep.subr.bf16.mxu0 0
        %647 = vmatpush1.bf16.msra.mxu0 0
        %648 = vmatprep.subr.bf16.mxu0 0
        %649 = vmatpush1.bf16.msra.mxu0 0
        %650 = vmatprep.subr.bf16.mxu0 0
        %651 = vmatpush1.bf16.msra.mxu0 0
        %652 = vmatprep.subr.bf16.mxu0 0
        %653 = vmatpush1.bf16.msra.mxu0 0
        %654 = vmatprep.subr.bf16.mxu0 0
        %655 = vmatpush1.bf16.msra.mxu0 0
        %656 = vmatprep.subr.bf16.mxu0 0
        %657 = vmatpush1.bf16.msra.mxu0 0
        %658 = vmatprep.subr.bf16.mxu0 0
        %659 = vmatpush1.bf16.msra.mxu0 0
        %660 = vmatprep.subr.bf16.mxu0 0
        %661 = vmatpush1.bf16.msra.mxu0 0
        %662 = vmatprep.subr.bf16.mxu0 0
        %663 = vmatpush1.bf16.msra.mxu0 0
        %664 = vmatprep.mubr.bf16.mxu0 0
        %665 = vmatmul.mubr.bf16.gmra.mrb[0].mxu0 %v496
        %v666 = vpop.f32.mrb[0].mxu0
        %v667 = vadd.f32 %v297, %v666
        %v668 = vpop.f32.mrb[0].mxu0
        %v669 = vadd.f32 %v297, %v668
        %v670 = vpop.f32.mrb[0].mxu0
        %v671 = vadd.f32 %v302, %v670
        %v672 = vpop.f32.mrb[0].mxu0
        %v673 = vadd.f32 %v302, %v672
        %674 = vmatprep.mubr.bf16.mxu0 0
        %675 = vmatmul.mubr.bf16.gmra.mrb[0].mxu0 %v499
        %v676 = vpop.f32.mrb[0].mxu0
        %v677 = vadd.f32 %v307, %v676
        %v678 = vpop.f32.mrb[0].mxu0
        %v679 = vadd.f32 %v307, %v678
        %v680 = vpop.f32.mrb[0].mxu0
        %v681 = vadd.f32 %v312, %v680
        %v682 = vpop.f32.mrb[0].mxu0
        %v683 = vadd.f32 %v312, %v682
        %684 = vmatprep.mubr.bf16.mxu0 0
        %685 = vmatmul.mubr.bf16.gmra.mrb[0].mxu0 %v502
        %v686 = vpop.f32.mrb[0].mxu0
        %v687 = vadd.f32 %v317, %v686
        %v688 = vpop.f32.mrb[0].mxu0
        %v689 = vadd.f32 %v317, %v688
        %v690 = vpop.f32.mrb[0].mxu0
        %v691 = vadd.f32 %v322, %v690
        %v692 = vpop.f32.mrb[0].mxu0
        %v693 = vadd.f32 %v322, %v692
        %694 = vmatprep.mubr.bf16.mxu0 0
        %695 = vmatmul.mubr.bf16.gmra.mrb[0].mxu0 %v505
        %v696 = vpop.f32.mrb[0].mxu0
        %v697 = vadd.f32 %v327, %v696
        %v698 = vpop.f32.mrb[0].mxu0
        %v699 = vadd.f32 %v327, %v698
        %v700 = vpop.f32.mrb[0].mxu0
        %v701 = vadd.f32 %v332, %v700
        %v702 = vpop.f32.mrb[0].mxu0
        %v703 = vadd.f32 %v332, %v702
        %704 = vmatprep.mubr.bf16.mxu0 0
        %705 = vmatmul.mubr.bf16.gmra.mrb[0].mxu0 %v508
        %v706 = vpop.f32.mrb[0].mxu0
        %v707 = vadd.f32 %v337, %v706
        %v708 = vpop.f32.mrb[0].mxu0
        %v709 = vadd.f32 %v337, %v708
        %v710 = vpop.f32.mrb[0].mxu0
        %v711 = vadd.f32 %v342, %v710
        %v712 = vpop.f32.mrb[0].mxu0
        %v713 = vadd.f32 %v342, %v712
        %714 = vmatprep.mubr.bf16.mxu0 0
        %715 = vmatmul.mubr.bf16.gmra.mrb[0].mxu0 %v511
        %v716 = vpop.f32.mrb[0].mxu0
        %v717 = vadd.f32 %v347, %v716
        %v718 = vpop.f32.mrb[0].mxu0
        %v719 = vadd.f32 %v347, %v718
        %v720 = vpop.f32.mrb[0].mxu0
        %v721 = vadd.f32 %v352, %v720
        %v722 = vpop.f32.mrb[0].mxu0
        %v723 = vadd.f32 %v352, %v722
        %724 = vmatprep.mubr.bf16.mxu0 0
        %725 = vmatmul.mubr.bf16.gmra.mrb[0].mxu0 %v514
        %v726 = vpop.f32.mrb[0].mxu0
        %v727 = vadd.f32 %v357, %v726
        %v728 = vpop.f32.mrb[0].mxu0
        %v729 = vadd.f32 %v357, %v728
        %v730 = vpop.f32.mrb[0].mxu0
        %v731 = vadd.f32 %v362, %v730
        %v732 = vpop.f32.mrb[0].mxu0
        %v733 = vadd.f32 %v362, %v732
        %734 = vmatprep.mubr.bf16.mxu0 0
        %735 = vmatmul.mubr.bf16.gmra.mrb[0].mxu0 %v517
        %v736 = vpop.f32.mrb[0].mxu0
        %v737 = vadd.f32 %v367, %v736
        %v738 = vpop.f32.mrb[0].mxu0
        %v739 = vadd.f32 %v367, %v738
        %v740 = vpop.f32.mrb[0].mxu0
        %v741 = vadd.f32 %v372, %v740
        %v742 = vpop.f32.mrb[0].mxu0
        %v743 = vadd.f32 %v372, %v742
        %744 = vdwg.mxu0
        %v745 = vpack.c.bf16 %v558, %v554
        %v746 = vpack.c.bf16 %v560, %v556
        %v747 = vpack.c.bf16 %v671, %v667
        %v748 = vpack.c.bf16 %v673, %v669
        %v749 = vpack.c.bf16 %v568, %v564
        %v750 = vpack.c.bf16 %v570, %v566
        %v751 = vpack.c.bf16 %v681, %v677
        %v752 = vpack.c.bf16 %v683, %v679
        %v753 = vpack.c.bf16 %v578, %v574
        %v754 = vpack.c.bf16 %v580, %v576
        %v755 = vpack.c.bf16 %v691, %v687
        %v756 = vpack.c.bf16 %v693, %v689
        %v757 = vpack.c.bf16 %v588, %v584
        %v758 = vpack.c.bf16 %v590, %v586
        %v759 = vpack.c.bf16 %v701, %v697
        %v760 = vpack.c.bf16 %v703, %v699
        %v761 = vpack.c.bf16 %v598, %v594
        %v762 = vpack.c.bf16 %v600, %v596
        %v763 = vpack.c.bf16 %v711, %v707
        %v764 = vpack.c.bf16 %v713, %v709
        %v765 = vpack.c.bf16 %v608, %v604
        %v766 = vpack.c.bf16 %v610, %v606
        %v767 = vpack.c.bf16 %v721, %v717
        %v768 = vpack.c.bf16 %v723, %v719
        %v769 = vpack.c.bf16 %v618, %v614
        %v770 = vpack.c.bf16 %v620, %v616
        %v771 = vpack.c.bf16 %v731, %v727
        %v772 = vpack.c.bf16 %v733, %v729
        %v773 = vpack.c.bf16 %v628, %v624
        %v774 = vpack.c.bf16 %v630, %v626
        %v775 = vpack.c.bf16 %v741, %v737
        %v776 = vpack.c.bf16 %v743, %v739
        %v777 = vtanh.bf16.pop %v745
        %v778 = vtanh.bf16.pop %v746
        %v779 = vtanh.bf16.pop %v747
        %v780 = vtanh.bf16.pop %v748
        %v781 = vtanh.bf16.pop %v749
        %v782 = vtanh.bf16.pop %v750
        %v783 = vtanh.bf16.pop %v751
        %v784 = vtanh.bf16.pop %v752
        %v785 = vtanh.bf16.pop %v753
        %v786 = vtanh.bf16.pop %v754
        %v787 = vtanh.bf16.pop %v755
        %v788 = vtanh.bf16.pop %v756
        %v789 = vtanh.bf16.pop %v757
        %v790 = vtanh.bf16.pop %v758
        %v791 = vtanh.bf16.pop %v759
        %v792 = vtanh.bf16.pop %v760
        %v793 = vtanh.bf16.pop %v761
        %v794 = vtanh.bf16.pop %v762
        %v795 = vtanh.bf16.pop %v763
        %v796 = vtanh.bf16.pop %v764
        %v797 = vtanh.bf16.pop %v765
        %v798 = vtanh.bf16.pop %v766
        %v799 = vtanh.bf16.pop %v767
        %v800 = vtanh.bf16.pop %v768
        %v801 = vtanh.bf16.pop %v769
        %v802 = vtanh.bf16.pop %v770
        %v803 = vtanh.bf16.pop %v771
        %v804 = vtanh.bf16.pop %v772
        %v805 = vtanh.bf16.pop %v773
        %v806 = vtanh.bf16.pop %v774
        %v807 = vtanh.bf16.pop %v775
        %v808 = vtanh.bf16.pop %v776
        %v809 = vld [vmem:[%s0] sm:$0xf]
        %810 = vmatprep.subr.bf16.mxu0 %v778
        %811 = vmatpush1.bf16.msra.mxu0 %v777
        %812 = vmatprep.subr.bf16.mxu0 %v782
        %813 = vmatpush1.bf16.msra.mxu0 %v781
        %814 = vmatprep.subr.bf16.mxu0 %v786
        %815 = vmatpush1.bf16.msra.mxu0 %v785
        %816 = vmatprep.subr.bf16.mxu0 %v790
        %817 = vmatpush1.bf16.msra.mxu0 %v789
        %818 = vmatprep.subr.bf16.mxu0 %v794
        %819 = vmatpush1.bf16.msra.mxu0 %v793
        %820 = vmatprep.subr.bf16.mxu0 %v798
        %821 = vmatpush1.bf16.msra.mxu0 %v797
        %822 = vmatprep.subr.bf16.mxu0 %v802
        %823 = vmatpush1.bf16.msra.mxu0 %v801
        %824 = vmatprep.subr.bf16.mxu0 %v806
        %825 = vmatpush1.bf16.msra.mxu0 %v805
        %826 = vmatprep.subr.bf16.mxu0 0
        %827 = vmatpush1.bf16.msra.mxu0 0
        %828 = vmatprep.subr.bf16.mxu0 0
        %829 = vmatpush1.bf16.msra.mxu0 0
        %830 = vmatprep.subr.bf16.mxu0 0
        %831 = vmatpush1.bf16.msra.mxu0 0
        %832 = vmatprep.subr.bf16.mxu0 0
        %833 = vmatpush1.bf16.msra.mxu0 0
        %834 = vmatprep.subr.bf16.mxu0 0
        %835 = vmatpush1.bf16.msra.mxu0 0
        %836 = vmatprep.subr.bf16.mxu0 0
        %837 = vmatpush1.bf16.msra.mxu0 0
        %838 = vmatprep.subr.bf16.mxu0 0
        %839 = vmatpush1.bf16.msra.mxu0 0
        %840 = vmatprep.subr.bf16.mxu0 0
        %841 = vmatpush1.bf16.msra.mxu0 0
        %842 = vmatprep.mubr.bf16.mxu0 0
        %843 = vmatmul.mubr.bf16.gmra.mrb[0].mxu0 %v809
        %v844 = vpop.f32.mrb[0].mxu0
        %v845 = vadd.f32 0.0, %v844
        %v846 = vpop.f32.mrb[0].mxu0
        %v847 = vadd.f32 0.0, %v846
        %v848 = vpop.f32.mrb[0].mxu0
        %v849 = vpop.f32.mrb[0].mxu0
        %850 = vdwg.mxu0
        %851 = vmatprep.subr.bf16.mxu0 %v780
        %852 = vmatpush1.bf16.msra.mxu0 %v779
        %853 = vmatprep.subr.bf16.mxu0 %v784
        %854 = vmatpush1.bf16.msra.mxu0 %v783
        %855 = vmatprep.subr.bf16.mxu0 %v788
        %856 = vmatpush1.bf16.msra.mxu0 %v787
        %857 = vmatprep.subr.bf16.mxu0 %v792
        %858 = vmatpush1.bf16.msra.mxu0 %v791
        %859 = vmatprep.subr.bf16.mxu0 %v796
        %860 = vmatpush1.bf16.msra.mxu0 %v795
        %861 = vmatprep.subr.bf16.mxu0 %v800
        %862 = vmatpush1.bf16.msra.mxu0 %v799
        %863 = vmatprep.subr.bf16.mxu0 %v804
        %864 = vmatpush1.bf16.msra.mxu0 %v803
        %865 = vmatprep.subr.bf16.mxu0 %v808
        %866 = vmatpush1.bf16.msra.mxu0 %v807
        %867 = vmatprep.subr.bf16.mxu0 0
        %868 = vmatpush1.bf16.msra.mxu0 0
        %869 = vmatprep.subr.bf16.mxu0 0
        %870 = vmatpush1.bf16.msra.mxu0 0
        %871 = vmatprep.subr.bf16.mxu0 0
        %872 = vmatpush1.bf16.msra.mxu0 0
        %873 = vmatprep.subr.bf16.mxu0 0
        %874 = vmatpush1.bf16.msra.mxu0 0
        %875 = vmatprep.subr.bf16.mxu0 0
        %876 = vmatpush1.bf16.msra.mxu0 0
        %877 = vmatprep.subr.bf16.mxu0 0
        %878 = vmatpush1.bf16.msra.mxu0 0
        %879 = vmatprep.subr.bf16.mxu0 0
        %880 = vmatpush1.bf16.msra.mxu0 0
        %881 = vmatprep.subr.bf16.mxu0 0
        %882 = vmatpush1.bf16.msra.mxu0 0
        %883 = vmatprep.mubr.bf16.mxu0 0
        %884 = vmatmul.mubr.bf16.gmra.mrb[0].mxu0 %v809
        %v885 = vpop.f32.mrb[0].mxu0
        %v886 = vadd.f32 0.0, %v885
        %v887 = vpop.f32.mrb[0].mxu0
        %v888 = vadd.f32 0.0, %v887
        %v889 = vpop.f32.mrb[0].mxu0
        %v890 = vpop.f32.mrb[0].mxu0
        %891 = vdwg.mxu0
        %v892 = vmul.bf16 %v777, %v777
        %v893 = vmul.bf16 %v778, %v778
        %v894 = vmul.bf16 %v779, %v779
        %v895 = vmul.bf16 %v780, %v780
        %v896 = vmul.bf16 %v781, %v781
        %v897 = vmul.bf16 %v782, %v782
        %v898 = vmul.bf16 %v783, %v783
        %v899 = vmul.bf16 %v784, %v784
        %v900 = vmul.bf16 %v785, %v785
        %v901 = vmul.bf16 %v786, %v786
        %v902 = vmul.bf16 %v787, %v787
        %v903 = vmul.bf16 %v788, %v788
        %v904 = vmul.bf16 %v789, %v789
        %v905 = vmul.bf16 %v790, %v790
        %v906 = vmul.bf16 %v791, %v791
        %v907 = vmul.bf16 %v792, %v792
        %v908 = vmul.bf16 %v793, %v793
        %v909 = vmul.bf16 %v794, %v794
        %v910 = vmul.bf16 %v795, %v795
        %v911 = vmul.bf16 %v796, %v796
        %v912 = vmul.bf16 %v797, %v797
        %v913 = vmul.bf16 %v798, %v798
        %v914 = vmul.bf16 %v799, %v799
        %v915 = vmul.bf16 %v800, %v800
        %v916 = vmul.bf16 %v801, %v801
        %v917 = vmul.bf16 %v802, %v802
        %v918 = vmul.bf16 %v803, %v803
        %v919 = vmul.bf16 %v804, %v804
        %v920 = vmul.bf16 %v805, %v805
        %v921 = vmul.bf16 %v806, %v806
        %v922 = vmul.bf16 %v807, %v807
        %v923 = vmul.bf16 %v808, %v808
        %v924 = vunpack.c.l.bf16 %v892
        %v925 = vunpack.c.l.bf16 %v893
        %v926 = vunpack.c.l.bf16 %v894
        %v927 = vunpack.c.l.bf16 %v895
        %v928 = vunpack.c.h.bf16 %v892
        %v929 = vunpack.c.h.bf16 %v893
        %v930 = vunpack.c.h.bf16 %v894
        %v931 = vunpack.c.h.bf16 %v895
        %v932 = vunpack.c.l.bf16 %v896
        %v933 = vunpack.c.l.bf16 %v897
        %v934 = vunpack.c.l.bf16 %v898
        %v935 = vunpack.c.l.bf16 %v899
        %v936 = vunpack.c.h.bf16 %v896
        %v937 = vunpack.c.h.bf16 %v897
        %v938 = vunpack.c.h.bf16 %v898
        %v939 = vunpack.c.h.bf16 %v899
        %v940 = vunpack.c.l.bf16 %v900
        %v941 = vunpack.c.l.bf16 %v901
        %v942 = vunpack.c.l.bf16 %v902
        %v943 = vunpack.c.l.bf16 %v903
        %v944 = vunpack.c.h.bf16 %v900
        %v945 = vunpack.c.h.bf16 %v901
        %v946 = vunpack.c.h.bf16 %v902
        %v947 = vunpack.c.h.bf16 %v903
        %v948 = vunpack.c.l.bf16 %v904
        %v949 = vunpack.c.l.bf16 %v905
        %v950 = vunpack.c.l.bf16 %v906
        %v951 = vunpack.c.l.bf16 %v907
        %v952 = vunpack.c.h.bf16 %v904
        %v953 = vunpack.c.h.bf16 %v905
        %v954 = vunpack.c.h.bf16 %v906
        %v955 = vunpack.c.h.bf16 %v907
        %v956 = vunpack.c.l.bf16 %v908
        %v957 = vunpack.c.l.bf16 %v909
        %v958 = vunpack.c.l.bf16 %v910
        %v959 = vunpack.c.l.bf16 %v911
        %v960 = vunpack.c.h.bf16 %v908
        %v961 = vunpack.c.h.bf16 %v909
        %v962 = vunpack.c.h.bf16 %v910
        %v963 = vunpack.c.h.bf16 %v911
        %v964 = vunpack.c.l.bf16 %v912
        %v965 = vunpack.c.l.bf16 %v913
        %v966 = vunpack.c.l.bf16 %v914
        %v967 = vunpack.c.l.bf16 %v915
        %v968 = vunpack.c.h.bf16 %v912
        %v969 = vunpack.c.h.bf16 %v913
        %v970 = vunpack.c.h.bf16 %v914
        %v971 = vunpack.c.h.bf16 %v915
        %v972 = vunpack.c.l.bf16 %v916
        %v973 = vunpack.c.l.bf16 %v917
        %v974 = vunpack.c.l.bf16 %v918
        %v975 = vunpack.c.l.bf16 %v919
        %v976 = vunpack.c.h.bf16 %v916
        %v977 = vunpack.c.h.bf16 %v917
        %v978 = vunpack.c.h.bf16 %v918
        %v979 = vunpack.c.h.bf16 %v919
        %v980 = vunpack.c.l.bf16 %v920
        %v981 = vunpack.c.l.bf16 %v921
        %v982 = vunpack.c.l.bf16 %v922
        %v983 = vunpack.c.l.bf16 %v923
        %v984 = vunpack.c.h.bf16 %v920
        %v985 = vunpack.c.h.bf16 %v921
        %v986 = vunpack.c.h.bf16 %v922
        %v987 = vunpack.c.h.bf16 %v923
        %v988 = vadd.f32 %v924, %v928
        %v989 = vadd.f32 %v988, %v932
        %v990 = vadd.f32 %v989, %v936
        %v991 = vadd.f32 %v990, %v940
        %v992 = vadd.f32 %v991, %v944
        %v993 = vadd.f32 %v992, %v948
        %v994 = vadd.f32 %v993, %v952
        %v995 = vadd.f32 %v994, %v956
        %v996 = vadd.f32 %v995, %v960
        %v997 = vadd.f32 %v996, %v964
        %v998 = vadd.f32 %v997, %v968
        %v999 = vadd.f32 %v998, %v972
        %v1000 = vadd.f32 %v999, %v976
        %v1001 = vadd.f32 %v1000, %v980
        %v1002 = vadd.f32 %v1001, %v984
        %v1003 = vrot.slane %v1002, 4
        %v1004 = vadd.f32 %v1002, %v1003
        %v1005 = vrot.slane %v1004, 2
        %v1006 = vadd.f32 %v1004, %v1005
        %v1007 = vrot.slane %v1006, 1
        %v1008 = vadd.f32 %v1006, %v1007
        %v1009 = vadd.f32 %v925, %v929
        %v1010 = vadd.f32 %v1009, %v933
        %v1011 = vadd.f32 %v1010, %v937
        %v1012 = vadd.f32 %v1011, %v941
        %v1013 = vadd.f32 %v1012, %v945
        %v1014 = vadd.f32 %v1013, %v949
        %v1015 = vadd.f32 %v1014, %v953
        %v1016 = vadd.f32 %v1015, %v957
        %v1017 = vadd.f32 %v1016, %v961
        %v1018 = vadd.f32 %v1017, %v965
        %v1019 = vadd.f32 %v1018, %v969
        %v1020 = vadd.f32 %v1019, %v973
        %v1021 = vadd.f32 %v1020, %v977
        %v1022 = vadd.f32 %v1021, %v981
        %v1023 = vadd.f32 %v1022, %v985
        %v1024 = vrot.slane %v1023, 4
        %v1025 = vadd.f32 %v1023, %v1024
        %v1026 = vrot.slane %v1025, 2
        %v1027 = vadd.f32 %v1025, %v1026
        %v1028 = vrot.slane %v1027, 1
        %v1029 = vadd.f32 %v1027, %v1028
        %v1030 = vadd.f32 %v926, %v930
        %v1031 = vadd.f32 %v1030, %v934
        %v1032 = vadd.f32 %v1031, %v938
        %v1033 = vadd.f32 %v1032, %v942
        %v1034 = vadd.f32 %v1033, %v946
        %v1035 = vadd.f32 %v1034, %v950
        %v1036 = vadd.f32 %v1035, %v954
        %v1037 = vadd.f32 %v1036, %v958
        %v1038 = vadd.f32 %v1037, %v962
        %v1039 = vadd.f32 %v1038, %v966
        %v1040 = vadd.f32 %v1039, %v970
        %v1041 = vadd.f32 %v1040, %v974
        %v1042 = vadd.f32 %v1041, %v978
        %v1043 = vadd.f32 %v1042, %v982
        %v1044 = vadd.f32 %v1043, %v986
        %v1045 = vrot.slane %v1044, 4
        %v1046 = vadd.f32 %v1044, %v1045
        %v1047 = vrot.slane %v1046, 2
        %v1048 = vadd.f32 %v1046, %v1047
        %v1049 = vrot.slane %v1048, 1
        %v1050 = vadd.f32 %v1048, %v1049
        %v1051 = vadd.f32 %v927, %v931
        %v1052 = vadd.f32 %v1051, %v935
        %v1053 = vadd.f32 %v1052, %v939
        %v1054 = vadd.f32 %v1053, %v943
        %v1055 = vadd.f32 %v1054, %v947
        %v1056 = vadd.f32 %v1055, %v951
        %v1057 = vadd.f32 %v1056, %v955
        %v1058 = vadd.f32 %v1057, %v959
        %v1059 = vadd.f32 %v1058, %v963
        %v1060 = vadd.f32 %v1059, %v967
        %v1061 = vadd.f32 %v1060, %v971
        %v1062 = vadd.f32 %v1061, %v975
        %v1063 = vadd.f32 %v1062, %v979
        %v1064 = vadd.f32 %v1063, %v983
        %v1065 = vadd.f32 %v1064, %v987
        %v1066 = vrot.slane %v1065, 4
        %v1067 = vadd.f32 %v1065, %v1066
        %v1068 = vrot.slane %v1067, 2
        %v1069 = vadd.f32 %v1067, %v1068
        %v1070 = vrot.slane %v1069, 1
        %v1071 = vadd.f32 %v1069, %v1070
        %v1072 = vmax.f32 %v1008, 1e-12
        %v1073 = vmax.f32 %v1029, 1e-12
        %v1074 = vmax.f32 %v1050, 1e-12
        %v1075 = vmax.f32 %v1071, 1e-12
        %v1076 = vrsqrt.pop %v1072
        %v1077 = vrsqrt.pop %v1073
        %v1078 = vrsqrt.pop %v1074
        %v1079 = vrsqrt.pop %v1075
        %v1080 = vmul.f32 %v845, %v1076
        %v1081 = vmul.f32 %v847, %v1077
        %v1082 = vmul.f32 %v886, %v1078
        %v1083 = vmul.f32 %v888, %v1079
        %v1084 = vld [vmem:[%s1] sm:$0xff]
        %1086 = vset.pattern.permute.xlu0 0
        %1087 = vperm.xlu0 %1086, %v1084
        %v1088 = vpop.permute.xlu0 %1087
        %v1090 = vmul.f32 %v1080, %v1088
        %v1091 = vmul.f32 %v1081, %v1088
        %v1092 = vmul.f32 %v1082, %v1088
        %v1093 = vmul.f32 %v1083, %v1088
        %1094 = vst [vmem:[%s242] sm:$0xff] %v1090
        %1095 = vst [vmem:[%s242 + $0x8] sm:$0xff] %v1091
        %1096 = vst [vmem:[%s242 + $0x10] sm:$0xff] %v1092
        %1097 = vst [vmem:[%s242 + $0x18] sm:$0xff] %v1093
        %s1098 = sand.u32 %s140, 1
        %s1099 = scalar_lea.sflag [#allocation4], %s1098
        %s1100 = sand.u32 %s140, 1
        %s1101 = smul.addr %s1100, 32
        %s1102 = scalar_lea.vmem [#allocation5], %s1101
        // Predicated region
        $region45: #{tpu_custom_call.1} parent=39 // pred_check
          %p1103 = pneg %p150
        $region46: #{tpu_custom_call.1} parent=39 // pred_check_branch
          %1105 = sbr.rel (%p1103) target = $region48
        $region47: #{tpu_custom_call.1} parent=39 // pred_region
          %s1106 = smul.u32 4, %s22
          %s1108 = ssub.s32 512, 512
          %1109 = vsyncadd %s1099, %s1108
          %s1110 = smul.addr %s1106, 128
          %s1111 = scalar_lea.hbm %s5, %s1110
          %s1113 = sshll.u32 %s1102, 4
          %s1114 = int_to_ptr.vmem [resolvable:$true] %s1113
          %1116 = dma.vmem_to_hbm [thread:$0]  %s1114, 512, %s1111, %s1099
        $region48: #{tpu_custom_call.1} parent=39 // pred_fallthru
          _
      $region40: #{tpu_custom_call.1} parent=5 // pred_fallthru
        _
      %p1117 = scmp.le.s32.totalorder 2, %s17
      // Predicated region
      $region49: #{tpu_custom_call.1} parent=5 // pred_check
        %p1118 = pneg %p1117
      $region50: #{tpu_custom_call.1} parent=5 // pred_check_branch
        %1120 = sbr.rel (%p1118) target = $region52
      $region51: #{tpu_custom_call.1} parent=5 // pred_region
        %s1121 = ssub.s32 %s17, 2
        // Predicated region
        $region53: #{tpu_custom_call.1} parent=51 // pred_check
          %p1122 = pneg %p156
        $region54: #{tpu_custom_call.1} parent=51 // pred_check_branch
          %1124 = sbr.rel (%p1122) target = $region56
        $region55: #{tpu_custom_call.1} parent=51 // pred_region
          %s1125 = sand.u32 %s141, 1
          %s1126 = scalar_lea.sflag [#allocation4], %s1125
          %s1127 = sand.u32 %s141, 1
          %s1128 = smul.addr %s1127, 32
          %s1129 = scalar_lea.vmem [#allocation5], %s1128
          %1130 = dma.done %s1126, 512
        $region56: #{tpu_custom_call.1} parent=51 // pred_fallthru
          _
      $region52: #{tpu_custom_call.1} parent=5 // pred_fallthru
        _
    $region6: #{tpu_custom_call.1} parent=1 // loop_footer
      %s21 = sadd.s32 1, %s17
    $region7: #{tpu_custom_call.1} parent=1 // loop_footer_branch
      %16 = sbr.rel target = $region3
    $region8: #{tpu_custom_call.1} parent=1 // loop_exit
      _
    %1131 = vsyncpa [#allocation3], 1
    %s1132 = scalar_lea.sflag [#allocation3], 1
    %1133 = vsyncpa %s1132, 1
    %1134 = vsyncpa [#allocation4], 1
    %s1135 = scalar_lea.sflag [#allocation4], 1
    %1136 = vsyncpa %s1135, 1

</llo_original>
